<compile_context>
chip_gen: v7x
topology: tpu7x:2x2x1
jax: 0.10.0
libtpu: 0.0.40
codegen_flags: <defaults>
</compile_context>

<pallas_src>
import jax
import jax.numpy as jnp
from jax.experimental import pallas as pl
from jax.experimental.pallas import tpu as pltpu

# ----- problem sizes (consistent with the module) -----
BATCH = 512               # rows per call (stacked envs / timesteps)
STATE_DIM = 16
INTEGRATOR_DIM = 4
OTHER_DIM = STATE_DIM - INTEGRATOR_DIM   # 12
MID_DIM = 32
ACTION_DIM = 4
OUT_ROWS = 8              # ACTION_DIM padded to a sublane multiple
LANE = 128                # lane tile; batch tile must be a multiple of this

# ----- state-consuming slab row layout (lane width = STATE_DIM = 16) -----
WS_W1_R0, WS_W1_R1 = 0, MID_DIM                     # rows  0..32 : w1^T (integrator cols zero)
WS_PK_R0, WS_PK_R1 = MID_DIM, MID_DIM + OUT_ROWS    # rows 32..40 : (priorK + integratorK)^T
WS_ROWS = WS_PK_R1                                  # 40

# ----- hidden-consuming slab row layout (lane width = MID_DIM = 32) -----
WH_W2_R0, WH_W2_R1 = 0, MID_DIM                     # rows  0..32 : w2^T
WH_W3_R0, WH_W3_R1 = WH_W2_R1, WH_W2_R1 + MID_DIM   # rows 32..64 : w3^T
WH_W4_R0, WH_W4_R1 = WH_W3_R1, WH_W3_R1 + OUT_ROWS  # rows 64..72 : w4^T (rows >= ACTION_DIM are 0)
WH_ROWS = WH_W4_R1                                  # 72

# ----- bias slab row layout (column vectors stacked along sublanes, lane width = 1) -----
BS_B1_R0 = 0
BS_B2_R0 = MID_DIM
BS_B3_R0 = 2 * MID_DIM
BS_B4_R0 = 3 * MID_DIM
BS_ROWS = 3 * MID_DIM + OUT_ROWS                    # 104


def actor_kernel(st_ref, ws_ref, wh_ref, bs_ref, out_ref):
    s = st_ref[...]                                        # (STATE_DIM, TB)  batch on lanes

    w1t = ws_ref[WS_W1_R0:WS_W1_R1, :]                     # (32, 16)
    pkt = ws_ref[WS_PK_R0:WS_PK_R1, :]                     # (8, 16)  priorK with integratorK folded

    w2t = wh_ref[WH_W2_R0:WH_W2_R1, :]                     # (32, 32)
    w3t = wh_ref[WH_W3_R0:WH_W3_R1, :]                     # (32, 32)
    w4t = wh_ref[WH_W4_R0:WH_W4_R1, :]                     # (8, 32)   rows >= ACTION_DIM are 0

    b1 = bs_ref[BS_B1_R0:BS_B1_R0 + MID_DIM, :]            # (32, 1)  lane-broadcast over batch
    b2 = bs_ref[BS_B2_R0:BS_B2_R0 + MID_DIM, :]
    b3 = bs_ref[BS_B3_R0:BS_B3_R0 + MID_DIM, :]
    b4 = bs_ref[BS_B4_R0:BS_B4_R0 + OUT_ROWS, :]           # (8, 1)

    # other_net: Linear -> Tanh -> Linear -> Tanh -> Linear -> Tanh -> Linear (transposed)
    h = jnp.tanh(jnp.dot(w1t, s, preferred_element_type=jnp.float32) + b1)   # (32, TB)
    h = jnp.tanh(jnp.dot(w2t, h, preferred_element_type=jnp.float32) + b2)   # (32, TB)
    h = jnp.tanh(jnp.dot(w3t, h, preferred_element_type=jnp.float32) + b3)   # (32, TB)

    tmp1 = jnp.dot(w4t, h, preferred_element_type=jnp.float32) + b4          # (8, TB)
    prior = jnp.dot(pkt, s, preferred_element_type=jnp.float32)              # (8, TB)

    # padded rows (>= ACTION_DIM): tanh(0) + 0 == 0, so the slab is safe to consume as-is.
    out_ref[...] = jnp.tanh(tmp1) + prior


def pack_params(params):
    """Fold integratorK into priorK and pack transposed weights into three resident slabs."""
    (w1, b1, w2, b2, w3, b3, w4, b4, intk, priork) = params

    # state @ priorK + state[:, OTHER_DIM:] @ integratorK == state @ pk_comb
    pk_comb = priork.at[OTHER_DIM:, :].add(intk)                              # (16, 4)

    # state-consuming slab (lane width = STATE_DIM)
    w1t = jnp.zeros((MID_DIM, STATE_DIM), jnp.float32).at[:, :OTHER_DIM].set(w1.T)
    pkt = jnp.zeros((OUT_ROWS, STATE_DIM), jnp.float32).at[:ACTION_DIM, :].set(pk_comb.T)
    ws = jnp.concatenate([w1t, pkt], axis=0)
    assert ws.shape == (WS_ROWS, STATE_DIM)

    # hidden-consuming slab (lane width = MID_DIM)
    w4t = jnp.zeros((OUT_ROWS, MID_DIM), jnp.float32).at[:ACTION_DIM, :].set(w4.T)
    wh = jnp.concatenate([w2.T, w3.T, w4t], axis=0)
    assert wh.shape == (WH_ROWS, MID_DIM)

    # bias slab: column vectors stacked along sublanes (lane width = 1)
    b4c = jnp.zeros((OUT_ROWS, 1), jnp.float32).at[:ACTION_DIM, 0].set(b4.reshape(-1))
    bs = jnp.concatenate(
        [b1.reshape(-1, 1), b2.reshape(-1, 1), b3.reshape(-1, 1), b4c], axis=0)
    assert bs.shape == (BS_ROWS, 1)

    return ws, wh, bs


def _num_tensorcores_per_chip():
    """Generation-dependent tiling: split the batch grid only where there are 2 TCs (v7x)."""
    try:
        kind = jax.devices()[0].device_kind.lower()
    except Exception:
        return 1
    if "v7" in kind or "tpu7" in kind:
        return 2
    return 1


def actor_forward(state, packed):
    ws, wh, bs = packed
    b = state.shape[0]

    # Pick TB: one block per TensorCore, rounded up to a lane multiple.
    nb = _num_tensorcores_per_chip()
    tb = -(-b // nb)
    tb = max(LANE, ((tb + LANE - 1) // LANE) * LANE)
    nb = pl.cdiv(b, tb)
    bp = nb * tb

    # layout plumbing: batch -> lane axis (tiny 32 KiB transpose)
    state_t = state.T
    if bp != b:
        state_t = jnp.pad(state_t, ((0, 0), (0, bp - b)))

    flops = 2 * bp * (STATE_DIM * MID_DIM + 2 * MID_DIM * MID_DIM
                      + MID_DIM * OUT_ROWS + STATE_DIM * OUT_ROWS)
    transcendentals = bp * (3 * MID_DIM + OUT_ROWS)
    bytes_accessed = 4 * (STATE_DIM * bp + OUT_ROWS * bp
                          + WS_ROWS * STATE_DIM + WH_ROWS * MID_DIM + BS_ROWS)

    out_t = pl.pallas_call(
        actor_kernel,
        out_shape=jax.ShapeDtypeStruct((OUT_ROWS, bp), jnp.float32),
        grid=(nb,),
        in_specs=[
            pl.BlockSpec((STATE_DIM, tb), lambda i: (0, i)),
            pl.BlockSpec((WS_ROWS, STATE_DIM), lambda i: (0, 0)),   # weights stay resident
            pl.BlockSpec((WH_ROWS, MID_DIM), lambda i: (0, 0)),     # weights stay resident
            pl.BlockSpec((BS_ROWS, 1), lambda i: (0, 0)),           # biases stay resident
        ],
        out_specs=pl.BlockSpec((OUT_ROWS, tb), lambda i: (0, i)),
        compiler_params=pltpu.CompilerParams(
            dimension_semantics=("parallel",),
        ),
        cost_estimate=pl.CostEstimate(
            flops=flops,
            transcendentals=transcendentals,
            bytes_accessed=bytes_accessed,
        ),
    )(state_t, ws, wh, bs)

    # tiny (8, B) = 16 KiB slab; slice the real rows and restore the module's (B, ACTION_DIM).
    return out_t[:ACTION_DIM, :b].T


def init_params(key):
    ks = jax.random.split(key, 10)

    def lin(kw, kb, fan_in, fan_out):
        bound = 1.0 / jnp.sqrt(jnp.float32(fan_in))
        w = jax.random.uniform(kw, (fan_in, fan_out), jnp.float32, -bound, bound)
        b = jax.random.uniform(kb, (1, fan_out), jnp.float32, -bound, bound)
        return w, b

    w1, b1 = lin(ks[0], ks[1], OTHER_DIM, MID_DIM)
    w2, b2 = lin(ks[2], ks[3], MID_DIM, MID_DIM)
    w3, b3 = lin(ks[4], ks[5], MID_DIM, MID_DIM)
    w4, b4 = lin(ks[6], ks[7], MID_DIM, ACTION_DIM)
    # layer_norm(..., std=0.1)-style scaling on the last Linear
    w4 = w4 * 0.1
    b4 = b4 * 0.0
    priork = jax.random.normal(ks[8], (STATE_DIM, ACTION_DIM), jnp.float32) * 0.01
    intk = jax.random.normal(ks[9], (INTEGRATOR_DIM, ACTION_DIM), jnp.float32) * 0.01
    return (w1, b1, w2, b2, w3, b3, w4, b4, intk, priork)


def reference_forward(state, params):
    """Pure-JAX mirror of the PyTorch module's forward (unfused, unpadded params)."""
    (w1, b1, w2, b2, w3, b3, w4, b4, intk, priork) = params
    x = state[:, :OTHER_DIM]
    h = jnp.tanh(x @ w1 + b1)
    h = jnp.tanh(h @ w2 + b2)
    h = jnp.tanh(h @ w3 + b3)
    tmp1 = h @ w4 + b4
    tmp2 = state[:, OTHER_DIM:] @ intk
    return jnp.tanh(tmp1) + tmp2 + state @ priork


if __name__ == "__main__":
    key = jax.random.PRNGKey(0)
    k_state, k_params = jax.random.split(key)
    state = jax.random.normal(k_state, (BATCH, STATE_DIM), jnp.float32)
    params = init_params(k_params)
    packed = pack_params(params)

    out = jax.block_until_ready(actor_forward(state, packed))
    ref = jax.block_until_ready(reference_forward(state, params))

    assert out.shape == (BATCH, ACTION_DIM)
    err = float(jnp.max(jnp.abs(out - ref)))
    assert err < 1e-5, f"kernel mismatch vs reference: {err}"

    print("KERNEL_OK")
</pallas_src>

<mosaic_0001>
module attributes {stable_mosaic.version = 11 : i64} {
  func.func @actor_kernel(%arg0: i32, %arg1: memref<16x512xf32, #tpu.memory_space<vmem>>, %arg2: memref<40x16xf32, #tpu.memory_space<vmem>>, %arg3: memref<72x32xf32, #tpu.memory_space<vmem>>, %arg4: memref<104x1xf32, #tpu.memory_space<vmem>>, %arg5: memref<8x512xf32, #tpu.memory_space<vmem>>) attributes {dimension_semantics = [#tpu.dimension_semantics<parallel>], iteration_bounds = array<i64: 1>, scalar_prefetch = 0 : i64, scratch_operands = 0 : i64, tpu.core_type = #tpu.core_type<tc>, window_params = [{transform_indices = @transform_0, window_bounds = array<i64: 16, 512>}, {pipeline_mode = #tpu.pipeline_mode<synchronous>, transform_indices = @transform_1, window_bounds = array<i64: 40, 16>}, {pipeline_mode = #tpu.pipeline_mode<synchronous>, transform_indices = @transform_2, window_bounds = array<i64: 72, 32>}, {pipeline_mode = #tpu.pipeline_mode<synchronous>, transform_indices = @transform_3, window_bounds = array<i64: 104, 1>}, {transform_indices = @transform_4, window_bounds = array<i64: 8, 512>}]} {
    %c0 = arith.constant 0 : index
    %c0_0 = arith.constant 0 : index
    %0 = vector.load %arg1[%c0, %c0_0] : memref<16x512xf32, #tpu.memory_space<vmem>>, vector<16x512xf32>
    %c0_1 = arith.constant 0 : index
    %c0_2 = arith.constant 0 : index
    %1 = vector.load %arg2[%c0_1, %c0_2] : memref<40x16xf32, #tpu.memory_space<vmem>>, vector<32x16xf32>
    %c32 = arith.constant 32 : index
    %c0_3 = arith.constant 0 : index
    %2 = vector.load %arg2[%c32, %c0_3] : memref<40x16xf32, #tpu.memory_space<vmem>>, vector<8x16xf32>
    %c0_4 = arith.constant 0 : index
    %c0_5 = arith.constant 0 : index
    %3 = vector.load %arg3[%c0_4, %c0_5] : memref<72x32xf32, #tpu.memory_space<vmem>>, vector<32x32xf32>
    %c32_6 = arith.constant 32 : index
    %c0_7 = arith.constant 0 : index
    %4 = vector.load %arg3[%c32_6, %c0_7] : memref<72x32xf32, #tpu.memory_space<vmem>>, vector<32x32xf32>
    %c64 = arith.constant 64 : index
    %c0_8 = arith.constant 0 : index
    %5 = vector.load %arg3[%c64, %c0_8] : memref<72x32xf32, #tpu.memory_space<vmem>>, vector<8x32xf32>
    %c0_9 = arith.constant 0 : index
    %c0_10 = arith.constant 0 : index
    %6 = vector.load %arg4[%c0_9, %c0_10] : memref<104x1xf32, #tpu.memory_space<vmem>>, vector<32x1xf32>
    %c32_11 = arith.constant 32 : index
    %c0_12 = arith.constant 0 : index
    %7 = vector.load %arg4[%c32_11, %c0_12] : memref<104x1xf32, #tpu.memory_space<vmem>>, vector<32x1xf32>
    %c64_13 = arith.constant 64 : index
    %c0_14 = arith.constant 0 : index
    %8 = vector.load %arg4[%c64_13, %c0_14] : memref<104x1xf32, #tpu.memory_space<vmem>>, vector<32x1xf32>
    %c96 = arith.constant 96 : index
    %c0_15 = arith.constant 0 : index
    %9 = vector.load %arg4[%c96, %c0_15] : memref<104x1xf32, #tpu.memory_space<vmem>>, vector<8x1xf32>
    %cst = arith.constant dense<0.000000e+00> : vector<32x512xf32>
    %10 = tpu.matmul %1, %0, %cst {dimension_numbers = #tpu.dot_dimension_numbers<[1], [0], [0], [1], [0, 0, 1, 1], [], []>} : vector<32x16xf32>, vector<16x512xf32>, vector<32x512xf32> -> vector<32x512xf32>
    %11 = vector.broadcast %6 : vector<32x1xf32> to vector<32x512xf32>
    %12 = arith.addf %10, %11 : vector<32x512xf32>
    %13 = math.tanh %12 : vector<32x512xf32>
    %cst_16 = arith.constant dense<0.000000e+00> : vector<32x512xf32>
    %14 = tpu.matmul %3, %13, %cst_16 {dimension_numbers = #tpu.dot_dimension_numbers<[1], [0], [0], [1], [0, 0, 1, 1], [], []>} : vector<32x32xf32>, vector<32x512xf32>, vector<32x512xf32> -> vector<32x512xf32>
    %15 = vector.broadcast %7 : vector<32x1xf32> to vector<32x512xf32>
    %16 = arith.addf %14, %15 : vector<32x512xf32>
    %17 = math.tanh %16 : vector<32x512xf32>
    %cst_17 = arith.constant dense<0.000000e+00> : vector<32x512xf32>
    %18 = tpu.matmul %4, %17, %cst_17 {dimension_numbers = #tpu.dot_dimension_numbers<[1], [0], [0], [1], [0, 0, 1, 1], [], []>} : vector<32x32xf32>, vector<32x512xf32>, vector<32x512xf32> -> vector<32x512xf32>
    %19 = vector.broadcast %8 : vector<32x1xf32> to vector<32x512xf32>
    %20 = arith.addf %18, %19 : vector<32x512xf32>
    %21 = math.tanh %20 : vector<32x512xf32>
    %cst_18 = arith.constant dense<0.000000e+00> : vector<8x512xf32>
    %22 = tpu.matmul %5, %21, %cst_18 {dimension_numbers = #tpu.dot_dimension_numbers<[1], [0], [0], [1], [0, 0, 1, 1], [], []>} : vector<8x32xf32>, vector<32x512xf32>, vector<8x512xf32> -> vector<8x512xf32>
    %23 = vector.broadcast %9 : vector<8x1xf32> to vector<8x512xf32>
    %24 = arith.addf %22, %23 : vector<8x512xf32>
    %cst_19 = arith.constant dense<0.000000e+00> : vector<8x512xf32>
    %25 = tpu.matmul %2, %0, %cst_19 {dimension_numbers = #tpu.dot_dimension_numbers<[1], [0], [0], [1], [0, 0, 1, 1], [], []>} : vector<8x16xf32>, vector<16x512xf32>, vector<8x512xf32> -> vector<8x512xf32>
    %26 = math.tanh %24 : vector<8x512xf32>
    %27 = arith.addf %26, %25 : vector<8x512xf32>
    %c0_20 = arith.constant 0 : index
    %c0_21 = arith.constant 0 : index
    %28 = vector.load %arg5[%c0_20, %c0_21] : memref<8x512xf32, #tpu.memory_space<vmem>>, vector<8x512xf32>
    tpu.vector_store %arg5[%c0_20, %c0_21], %27 {strides = array<i32>} : memref<8x512xf32, #tpu.memory_space<vmem>>, vector<8x512xf32>,
    return
  }
  func.func @transform_0(%arg0: i32) -> (i32, i32) {
    %c0_i32 = arith.constant 0 : i32
    %c0_i32_0 = arith.constant 0 : i32
    return %c0_i32, %arg0 : i32, i32
  }
  func.func @transform_1(%arg0: i32) -> (i32, i32) {
    %c0_i32 = arith.constant 0 : i32
    %c0_i32_0 = arith.constant 0 : i32
    %c0_i32_1 = arith.constant 0 : i32
    return %c0_i32, %c0_i32_0 : i32, i32
  }
  func.func @transform_2(%arg0: i32) -> (i32, i32) {
    %c0_i32 = arith.constant 0 : i32
    %c0_i32_0 = arith.constant 0 : i32
    %c0_i32_1 = arith.constant 0 : i32
    return %c0_i32, %c0_i32_0 : i32, i32
  }
  func.func @transform_3(%arg0: i32) -> (i32, i32) {
    %c0_i32 = arith.constant 0 : i32
    %c0_i32_0 = arith.constant 0 : i32
    %c0_i32_1 = arith.constant 0 : i32
    return %c0_i32, %c0_i32_0 : i32, i32
  }
  func.func @transform_4(%arg0: i32) -> (i32, i32) {
    %c0_i32 = arith.constant 0 : i32
    %c0_i32_0 = arith.constant 0 : i32
    return %c0_i32, %arg0 : i32, i32
  }
}

</mosaic_0001>

<llo_original>
// kernel: tpu_custom_call.1
$region0: #{tpu_custom_call.1}
  #allocation0 [shape = 'u32[]', space=smem, size = 0x4, offset = 0x4, fixed_abs, tag = 'smem constant byte address 0x4 - core index']
  #allocation1 [shape = 'u32[144,128]{1,0:T(1,128)}', space=vmem, size = 0x12000, scoped, tag = 'internal scratch']
  %s0 = inlined_call_operand.vmem [shape: f32[16,512], index: 0, kind: input, shape index: {}]
  %s1 = inlined_call_operand.vmem [shape: f32[40,16], index: 1, kind: input, shape index: {}]
  %s2 = inlined_call_operand.vmem [shape: f32[72,32], index: 2, kind: input, shape index: {}]
  %s3 = inlined_call_operand.vmem [shape: f32[104,1], index: 3, kind: input, shape index: {}]
  %s4 = inlined_call_operand.hbm [shape: f32[8,512], index: 4, kind: output, shape index: {}]
  %s5 = sld [smem:[#allocation0]]
  $region26: #{tpu_custom_call.1} parent=0
    _
  %s7 = ssub.s32 1, %s5
  %s8 = scalar_select 0, %s7, %s5
  $region1: #{tpu_custom_call.1} parent=0
    #allocation2 [shape = 'u8[16384]{0}', space=vmem, size = 0x4000, scoped, tag = 'output window, operand 0, single buffered']
    #allocation3 [shape = 's32[1]{0}', space=sflag, size = 0x4, scoped, tag = 'scoped memory for tpu_custom_call.1']
    %9 = vsyncpa [#allocation3], 0
    // Predicated region
    $region2: #{tpu_custom_call.1} parent=1 // pred_check
      _
    $region3: #{tpu_custom_call.1} parent=1 // pred_check_branch
      %11 = sbr.rel (0) target = $region5
    $region4: #{tpu_custom_call.1} parent=1 // pred_region
      _
    $region5: #{tpu_custom_call.1} parent=1 // pred_fallthru
      _
    // Predicated region
    $region6: #{tpu_custom_call.1} parent=1 // pred_check
      _
    $region7: #{tpu_custom_call.1} parent=1 // pred_check_branch
      %13 = sbr.rel (0) target = $region9
    $region8: #{tpu_custom_call.1} parent=1 // pred_region
      _
    $region9: #{tpu_custom_call.1} parent=1 // pred_fallthru
      _
    // Predicated region
    $region10: #{tpu_custom_call.1} parent=1 // pred_check
      _
    $region11: #{tpu_custom_call.1} parent=1 // pred_check_branch
      %15 = sbr.rel (0) target = $region13
    $region12: #{tpu_custom_call.1} parent=1 // pred_region
      _
    $region13: #{tpu_custom_call.1} parent=1 // pred_fallthru
      _
    // Predicated region
    $region14: #{tpu_custom_call.1} parent=1 // pred_check
      _
    $region15: #{tpu_custom_call.1} parent=1 // pred_check_branch
      %17 = sbr.rel (0) target = $region17
    $region16: #{tpu_custom_call.1} parent=1 // pred_region
      _
    $region17: #{tpu_custom_call.1} parent=1 // pred_fallthru
      _
    %v18 = vld [vmem:[%s0] sm:$0xff]
    %v19 = vld [vmem:[%s0 + $0x8] sm:$0xff]
    %v20 = vld [vmem:[%s0 + $0x10] sm:$0xff]
    %v21 = vld [vmem:[%s0 + $0x18] sm:$0xff]
    %v22 = vld [vmem:[%s0 + $0x20] sm:$0xff]
    %v23 = vld [vmem:[%s0 + $0x28] sm:$0xff]
    %v24 = vld [vmem:[%s0 + $0x30] sm:$0xff]
    %v25 = vld [vmem:[%s0 + $0x38] sm:$0xff]
    %v26 = vld [vmem:[%s1] sm:$0xff]
    %v27 = vld [vmem:[%s1 + $0x8] sm:$0xff]
    %v28 = vld [vmem:[%s1 + $0x10] sm:$0xff]
    %v29 = vld [vmem:[%s1 + $0x18] sm:$0xff]
    %v30 = vld [vmem:[%s1 + $0x20] sm:$0xff]
    %v31 = vld [vmem:[%s2] sm:$0xff]
    %v32 = vld [vmem:[%s2 + $0x8] sm:$0xff]
    %v33 = vld [vmem:[%s2 + $0x10] sm:$0xff]
    %v34 = vld [vmem:[%s2 + $0x18] sm:$0xff]
    %v35 = vld [vmem:[%s2 + $0x20] sm:$0xff]
    %v36 = vld [vmem:[%s2 + $0x28] sm:$0xff]
    %v37 = vld [vmem:[%s2 + $0x30] sm:$0xff]
    %v38 = vld [vmem:[%s2 + $0x38] sm:$0xff]
    %v39 = vld [vmem:[%s2 + $0x40] sm:$0xff]
    %v40 = vld [vmem:[%s3] sm:$0xff]
    %v41 = vld [vmem:[%s3 + $0x8] sm:$0xff]
    %v42 = vld [vmem:[%s3 + $0x10] sm:$0xff]
    %v43 = vld [vmem:[%s3 + $0x18] sm:$0xff]
    %v44 = vld [vmem:[%s3 + $0x20] sm:$0xff]
    %v45 = vld [vmem:[%s3 + $0x28] sm:$0xff]
    %v46 = vld [vmem:[%s3 + $0x30] sm:$0xff]
    %v47 = vld [vmem:[%s3 + $0x38] sm:$0xff]
    %v48 = vld [vmem:[%s3 + $0x40] sm:$0xff]
    %v49 = vld [vmem:[%s3 + $0x48] sm:$0xff]
    %v50 = vld [vmem:[%s3 + $0x50] sm:$0xff]
    %v51 = vld [vmem:[%s3 + $0x58] sm:$0xff]
    %v52 = vld [vmem:[%s3 + $0x60] sm:$0xff]
    %54 = vset.pattern.permute.xlu0 0
    %55 = vperm.xlu0 %54, %v40
    %v56 = vpop.permute.xlu0 %55
    %59 = vset.pattern.permute.xlu0 0
    %60 = vperm.xlu0 %59, %v41
    %v61 = vpop.permute.xlu0 %60
    %64 = vset.pattern.permute.xlu0 0
    %65 = vperm.xlu0 %64, %v42
    %v66 = vpop.permute.xlu0 %65
    %69 = vset.pattern.permute.xlu0 0
    %70 = vperm.xlu0 %69, %v43
    %v71 = vpop.permute.xlu0 %70
    %vm73 = vcmask 130048
    %v75 = vsel %vm73, %v26, 0
    %v78 = vsel %vm73, %v27, 0
    %v81 = vsel %vm73, %v28, 0
    %v84 = vsel %vm73, %v29, 0
    %86 = vmatprep.subr.mxu0 %v19
    %87 = vmatpush1.msra.mxu0 %v18
    %88 = vmatprep.subr.mxu0 %v23
    %89 = vmatpush1.msra.mxu0 %v22
    %90 = vmatprep.subr.mxu0 0.0
    %91 = vmatpush1.msra.mxu0 0.0
    %92 = vmatprep.subr.mxu0 0.0
    %93 = vmatpush1.msra.mxu0 0.0
    %94 = vmatprep.subr.mxu0 0.0
    %95 = vmatpush1.msra.mxu0 0.0
    %96 = vmatprep.subr.mxu0 0.0
    %97 = vmatpush1.msra.mxu0 0.0
    %98 = vmatprep.subr.mxu0 0.0
    %99 = vmatpush1.msra.mxu0 0.0
    %100 = vmatprep.subr.mxu0 0.0
    %101 = vmatpush1.msra.mxu0 0.0
    %102 = vmatprep.subr.mxu0 0.0
    %103 = vmatpush1.msra.mxu0 0.0
    %104 = vmatprep.subr.mxu0 0.0
    %105 = vmatpush1.msra.mxu0 0.0
    %106 = vmatprep.subr.mxu0 0.0
    %107 = vmatpush1.msra.mxu0 0.0
    %108 = vmatprep.subr.mxu0 0.0
    %109 = vmatpush1.msra.mxu0 0.0
    %110 = vmatprep.subr.mxu0 0.0
    %111 = vmatpush1.msra.mxu0 0.0
    %112 = vmatprep.subr.mxu0 0.0
    %113 = vmatpush1.msra.mxu0 0.0
    %114 = vmatprep.subr.mxu0 0.0
    %115 = vmatpush1.msra.mxu0 0.0
    %116 = vmatprep.subr.mxu0 0.0
    %117 = vmatpush1.msra.mxu0 0.0
    %118 = vmatprep.subr.mxu0 0.0
    %119 = vmatpush1.msra.mxu0 0.0
    %120 = vmatprep.subr.mxu0 0.0
    %121 = vmatpush1.msra.mxu0 0.0
    %122 = vmatprep.subr.mxu0 0.0
    %123 = vmatpush1.msra.mxu0 0.0
    %124 = vmatprep.subr.mxu0 0.0
    %125 = vmatpush1.msra.mxu0 0.0
    %126 = vmatprep.subr.mxu0 0.0
    %127 = vmatpush1.msra.mxu0 0.0
    %128 = vmatprep.subr.mxu0 0.0
    %129 = vmatpush1.msra.mxu0 0.0
    %130 = vmatprep.subr.mxu0 0.0
    %131 = vmatpush1.msra.mxu0 0.0
    %132 = vmatprep.subr.mxu0 0.0
    %133 = vmatpush1.msra.mxu0 0.0
    %134 = vmatprep.subr.mxu0 0.0
    %135 = vmatpush1.msra.mxu0 0.0
    %136 = vmatprep.subr.mxu0 0.0
    %137 = vmatpush1.msra.mxu0 0.0
    %138 = vmatprep.subr.mxu0 0.0
    %139 = vmatpush1.msra.mxu0 0.0
    %140 = vmatprep.subr.mxu0 0.0
    %141 = vmatpush1.msra.mxu0 0.0
    %142 = vmatprep.subr.mxu0 0.0
    %143 = vmatpush1.msra.mxu0 0.0
    %144 = vmatprep.subr.mxu0 0.0
    %145 = vmatpush1.msra.mxu0 0.0
    %146 = vmatprep.subr.mxu0 0.0
    %147 = vmatpush1.msra.mxu0 0.0
    %148 = vmatprep.subr.mxu0 0.0
    %149 = vmatpush1.msra.mxu0 0.0
    %150 = vmatprep.mubr.f32.mxu0 0.0
    %151 = vmatmul.mubr.f32.gmra.mrb[0].mxu0 %v75
    %v152 = vpop.f32.mrb[0].mxu0
    %v153 = vadd.f32 %v56, %v152
    %v154 = vpop.f32.mrb[0].mxu0
    %v155 = vadd.f32 %v56, %v154
    %156 = vmatprep.mubr.f32.mxu0 0.0
    %157 = vmatmul.mubr.f32.gmra.mrb[0].mxu0 %v78
    %v158 = vpop.f32.mrb[0].mxu0
    %v159 = vadd.f32 %v61, %v158
    %v160 = vpop.f32.mrb[0].mxu0
    %v161 = vadd.f32 %v61, %v160
    %162 = vmatprep.mubr.f32.mxu0 0.0
    %163 = vmatmul.mubr.f32.gmra.mrb[0].mxu0 %v81
    %v164 = vpop.f32.mrb[0].mxu0
    %v165 = vadd.f32 %v66, %v164
    %v166 = vpop.f32.mrb[0].mxu0
    %v167 = vadd.f32 %v66, %v166
    %168 = vmatprep.mubr.f32.mxu0 0.0
    %169 = vmatmul.mubr.f32.gmra.mrb[0].mxu0 %v84
    %v170 = vpop.f32.mrb[0].mxu0
    %v171 = vadd.f32 %v71, %v170
    %v172 = vpop.f32.mrb[0].mxu0
    %v173 = vadd.f32 %v71, %v172
    %174 = vdwg.mxu0
    %175 = vmatprep.subr.mxu0 %v21
    %176 = vmatpush1.msra.mxu0 %v20
    %177 = vmatprep.subr.mxu0 %v25
    %178 = vmatpush1.msra.mxu0 %v24
    %179 = vmatprep.subr.mxu0 0.0
    %180 = vmatpush1.msra.mxu0 0.0
    %181 = vmatprep.subr.mxu0 0.0
    %182 = vmatpush1.msra.mxu0 0.0
    %183 = vmatprep.subr.mxu0 0.0
    %184 = vmatpush1.msra.mxu0 0.0
    %185 = vmatprep.subr.mxu0 0.0
    %186 = vmatpush1.msra.mxu0 0.0
    %187 = vmatprep.subr.mxu0 0.0
    %188 = vmatpush1.msra.mxu0 0.0
    %189 = vmatprep.subr.mxu0 0.0
    %190 = vmatpush1.msra.mxu0 0.0
    %191 = vmatprep.subr.mxu0 0.0
    %192 = vmatpush1.msra.mxu0 0.0
    %193 = vmatprep.subr.mxu0 0.0
    %194 = vmatpush1.msra.mxu0 0.0
    %195 = vmatprep.subr.mxu0 0.0
    %196 = vmatpush1.msra.mxu0 0.0
    %197 = vmatprep.subr.mxu0 0.0
    %198 = vmatpush1.msra.mxu0 0.0
    %199 = vmatprep.subr.mxu0 0.0
    %200 = vmatpush1.msra.mxu0 0.0
    %201 = vmatprep.subr.mxu0 0.0
    %202 = vmatpush1.msra.mxu0 0.0
    %203 = vmatprep.subr.mxu0 0.0
    %204 = vmatpush1.msra.mxu0 0.0
    %205 = vmatprep.subr.mxu0 0.0
    %206 = vmatpush1.msra.mxu0 0.0
    %207 = vmatprep.subr.mxu0 0.0
    %208 = vmatpush1.msra.mxu0 0.0
    %209 = vmatprep.subr.mxu0 0.0
    %210 = vmatpush1.msra.mxu0 0.0
    %211 = vmatprep.subr.mxu0 0.0
    %212 = vmatpush1.msra.mxu0 0.0
    %213 = vmatprep.subr.mxu0 0.0
    %214 = vmatpush1.msra.mxu0 0.0
    %215 = vmatprep.subr.mxu0 0.0
    %216 = vmatpush1.msra.mxu0 0.0
    %217 = vmatprep.subr.mxu0 0.0
    %218 = vmatpush1.msra.mxu0 0.0
    %219 = vmatprep.subr.mxu0 0.0
    %220 = vmatpush1.msra.mxu0 0.0
    %221 = vmatprep.subr.mxu0 0.0
    %222 = vmatpush1.msra.mxu0 0.0
    %223 = vmatprep.subr.mxu0 0.0
    %224 = vmatpush1.msra.mxu0 0.0
    %225 = vmatprep.subr.mxu0 0.0
    %226 = vmatpush1.msra.mxu0 0.0
    %227 = vmatprep.subr.mxu0 0.0
    %228 = vmatpush1.msra.mxu0 0.0
    %229 = vmatprep.subr.mxu0 0.0
    %230 = vmatpush1.msra.mxu0 0.0
    %231 = vmatprep.subr.mxu0 0.0
    %232 = vmatpush1.msra.mxu0 0.0
    %233 = vmatprep.subr.mxu0 0.0
    %234 = vmatpush1.msra.mxu0 0.0
    %235 = vmatprep.subr.mxu0 0.0
    %236 = vmatpush1.msra.mxu0 0.0
    %237 = vmatprep.subr.mxu0 0.0
    %238 = vmatpush1.msra.mxu0 0.0
    %239 = vmatprep.mubr.f32.mxu0 0.0
    %240 = vmatmul.mubr.f32.gmra.mrb[0].mxu0 %v75
    %v241 = vpop.f32.mrb[0].mxu0
    %v242 = vadd.f32 %v56, %v241
    %v243 = vpop.f32.mrb[0].mxu0
    %v244 = vadd.f32 %v56, %v243
    %245 = vmatprep.mubr.f32.mxu0 0.0
    %246 = vmatmul.mubr.f32.gmra.mrb[0].mxu0 %v78
    %v247 = vpop.f32.mrb[0].mxu0
    %v248 = vadd.f32 %v61, %v247
    %v249 = vpop.f32.mrb[0].mxu0
    %v250 = vadd.f32 %v61, %v249
    %251 = vmatprep.mubr.f32.mxu0 0.0
    %252 = vmatmul.mubr.f32.gmra.mrb[0].mxu0 %v81
    %v253 = vpop.f32.mrb[0].mxu0
    %v254 = vadd.f32 %v66, %v253
    %v255 = vpop.f32.mrb[0].mxu0
    %v256 = vadd.f32 %v66, %v255
    %257 = vmatprep.mubr.f32.mxu0 0.0
    %258 = vmatmul.mubr.f32.gmra.mrb[0].mxu0 %v84
    %v259 = vpop.f32.mrb[0].mxu0
    %v260 = vadd.f32 %v71, %v259
    %v261 = vpop.f32.mrb[0].mxu0
    %v262 = vadd.f32 %v71, %v261
    %263 = vdwg.mxu0
    %v264 = vtanh.pop %v153
    %v265 = vtanh.pop %v155
    %v266 = vtanh.pop %v242
    %v267 = vtanh.pop %v244
    %v268 = vtanh.pop %v159
    %v269 = vtanh.pop %v161
    %v270 = vtanh.pop %v248
    %v271 = vtanh.pop %v250
    %v272 = vtanh.pop %v165
    %v273 = vtanh.pop %v167
    %v274 = vtanh.pop %v254
    %v275 = vtanh.pop %v256
    %v276 = vtanh.pop %v171
    %v277 = vtanh.pop %v173
    %v278 = vtanh.pop %v260
    %v279 = vtanh.pop %v262
    %281 = vset.pattern.permute.xlu0 0
    %282 = vperm.xlu0 %281, %v44
    %v283 = vpop.permute.xlu0 %282
    %286 = vset.pattern.permute.xlu0 0
    %287 = vperm.xlu0 %286, %v45
    %v288 = vpop.permute.xlu0 %287
    %291 = vset.pattern.permute.xlu0 0
    %292 = vperm.xlu0 %291, %v46
    %v293 = vpop.permute.xlu0 %292
    %296 = vset.pattern.permute.xlu0 0
    %297 = vperm.xlu0 %296, %v47
    %v298 = vpop.permute.xlu0 %297
    %vm300 = vcmask 261120
    %v302 = vsel %vm300, %v31, 0
    %v305 = vsel %vm300, %v32, 0
    %v308 = vsel %vm300, %v33, 0
    %v311 = vsel %vm300, %v34, 0
    %313 = vmatprep.subr.mxu0 %v265
    %314 = vmatpush1.msra.mxu0 %v264
    %315 = vmatprep.subr.mxu0 %v269
    %316 = vmatpush1.msra.mxu0 %v268
    %317 = vmatprep.subr.mxu0 %v273
    %318 = vmatpush1.msra.mxu0 %v272
    %319 = vmatprep.subr.mxu0 %v277
    %320 = vmatpush1.msra.mxu0 %v276
    %321 = vmatprep.subr.mxu0 0.0
    %322 = vmatpush1.msra.mxu0 0.0
    %323 = vmatprep.subr.mxu0 0.0
    %324 = vmatpush1.msra.mxu0 0.0
    %325 = vmatprep.subr.mxu0 0.0
    %326 = vmatpush1.msra.mxu0 0.0
    %327 = vmatprep.subr.mxu0 0.0
    %328 = vmatpush1.msra.mxu0 0.0
    %329 = vmatprep.subr.mxu0 0.0
    %330 = vmatpush1.msra.mxu0 0.0
    %331 = vmatprep.subr.mxu0 0.0
    %332 = vmatpush1.msra.mxu0 0.0
    %333 = vmatprep.subr.mxu0 0.0
    %334 = vmatpush1.msra.mxu0 0.0
    %335 = vmatprep.subr.mxu0 0.0
    %336 = vmatpush1.msra.mxu0 0.0
    %337 = vmatprep.subr.mxu0 0.0
    %338 = vmatpush1.msra.mxu0 0.0
    %339 = vmatprep.subr.mxu0 0.0
    %340 = vmatpush1.msra.mxu0 0.0
    %341 = vmatprep.subr.mxu0 0.0
    %342 = vmatpush1.msra.mxu0 0.0
    %343 = vmatprep.subr.mxu0 0.0
    %344 = vmatpush1.msra.mxu0 0.0
    %345 = vmatprep.subr.mxu0 0.0
    %346 = vmatpush1.msra.mxu0 0.0
    %347 = vmatprep.subr.mxu0 0.0
    %348 = vmatpush1.msra.mxu0 0.0
    %349 = vmatprep.subr.mxu0 0.0
    %350 = vmatpush1.msra.mxu0 0.0
    %351 = vmatprep.subr.mxu0 0.0
    %352 = vmatpush1.msra.mxu0 0.0
    %353 = vmatprep.subr.mxu0 0.0
    %354 = vmatpush1.msra.mxu0 0.0
    %355 = vmatprep.subr.mxu0 0.0
    %356 = vmatpush1.msra.mxu0 0.0
    %357 = vmatprep.subr.mxu0 0.0
    %358 = vmatpush1.msra.mxu0 0.0
    %359 = vmatprep.subr.mxu0 0.0
    %360 = vmatpush1.msra.mxu0 0.0
    %361 = vmatprep.subr.mxu0 0.0
    %362 = vmatpush1.msra.mxu0 0.0
    %363 = vmatprep.subr.mxu0 0.0
    %364 = vmatpush1.msra.mxu0 0.0
    %365 = vmatprep.subr.mxu0 0.0
    %366 = vmatpush1.msra.mxu0 0.0
    %367 = vmatprep.subr.mxu0 0.0
    %368 = vmatpush1.msra.mxu0 0.0
    %369 = vmatprep.subr.mxu0 0.0
    %370 = vmatpush1.msra.mxu0 0.0
    %371 = vmatprep.subr.mxu0 0.0
    %372 = vmatpush1.msra.mxu0 0.0
    %373 = vmatprep.subr.mxu0 0.0
    %374 = vmatpush1.msra.mxu0 0.0
    %375 = vmatprep.subr.mxu0 0.0
    %376 = vmatpush1.msra.mxu0 0.0
    %377 = vmatprep.mubr.f32.mxu0 0.0
    %378 = vmatmul.mubr.f32.gmra.mrb[0].mxu0 %v302
    %v379 = vpop.f32.mrb[0].mxu0
    %v380 = vadd.f32 %v283, %v379
    %v381 = vpop.f32.mrb[0].mxu0
    %v382 = vadd.f32 %v283, %v381
    %383 = vmatprep.mubr.f32.mxu0 0.0
    %384 = vmatmul.mubr.f32.gmra.mrb[0].mxu0 %v305
    %v385 = vpop.f32.mrb[0].mxu0
    %v386 = vadd.f32 %v288, %v385
    %v387 = vpop.f32.mrb[0].mxu0
    %v388 = vadd.f32 %v288, %v387
    %389 = vmatprep.mubr.f32.mxu0 0.0
    %390 = vmatmul.mubr.f32.gmra.mrb[0].mxu0 %v308
    %v391 = vpop.f32.mrb[0].mxu0
    %v392 = vadd.f32 %v293, %v391
    %v393 = vpop.f32.mrb[0].mxu0
    %v394 = vadd.f32 %v293, %v393
    %395 = vmatprep.mubr.f32.mxu0 0.0
    %396 = vmatmul.mubr.f32.gmra.mrb[0].mxu0 %v311
    %v397 = vpop.f32.mrb[0].mxu0
    %v398 = vadd.f32 %v298, %v397
    %v399 = vpop.f32.mrb[0].mxu0
    %v400 = vadd.f32 %v298, %v399
    %401 = vdwg.mxu0
    %402 = vmatprep.subr.mxu0 %v267
    %403 = vmatpush1.msra.mxu0 %v266
    %404 = vmatprep.subr.mxu0 %v271
    %405 = vmatpush1.msra.mxu0 %v270
    %406 = vmatprep.subr.mxu0 %v275
    %407 = vmatpush1.msra.mxu0 %v274
    %408 = vmatprep.subr.mxu0 %v279
    %409 = vmatpush1.msra.mxu0 %v278
    %410 = vmatprep.subr.mxu0 0.0
    %411 = vmatpush1.msra.mxu0 0.0
    %412 = vmatprep.subr.mxu0 0.0
    %413 = vmatpush1.msra.mxu0 0.0
    %414 = vmatprep.subr.mxu0 0.0
    %415 = vmatpush1.msra.mxu0 0.0
    %416 = vmatprep.subr.mxu0 0.0
    %417 = vmatpush1.msra.mxu0 0.0
    %418 = vmatprep.subr.mxu0 0.0
    %419 = vmatpush1.msra.mxu0 0.0
    %420 = vmatprep.subr.mxu0 0.0
    %421 = vmatpush1.msra.mxu0 0.0
    %422 = vmatprep.subr.mxu0 0.0
    %423 = vmatpush1.msra.mxu0 0.0
    %424 = vmatprep.subr.mxu0 0.0
    %425 = vmatpush1.msra.mxu0 0.0
    %426 = vmatprep.subr.mxu0 0.0
    %427 = vmatpush1.msra.mxu0 0.0
    %428 = vmatprep.subr.mxu0 0.0
    %429 = vmatpush1.msra.mxu0 0.0
    %430 = vmatprep.subr.mxu0 0.0
    %431 = vmatpush1.msra.mxu0 0.0
    %432 = vmatprep.subr.mxu0 0.0
    %433 = vmatpush1.msra.mxu0 0.0
    %434 = vmatprep.subr.mxu0 0.0
    %435 = vmatpush1.msra.mxu0 0.0
    %436 = vmatprep.subr.mxu0 0.0
    %437 = vmatpush1.msra.mxu0 0.0
    %438 = vmatprep.subr.mxu0 0.0
    %439 = vmatpush1.msra.mxu0 0.0
    %440 = vmatprep.subr.mxu0 0.0
    %441 = vmatpush1.msra.mxu0 0.0
    %442 = vmatprep.subr.mxu0 0.0
    %443 = vmatpush1.msra.mxu0 0.0
    %444 = vmatprep.subr.mxu0 0.0
    %445 = vmatpush1.msra.mxu0 0.0
    %446 = vmatprep.subr.mxu0 0.0
    %447 = vmatpush1.msra.mxu0 0.0
    %448 = vmatprep.subr.mxu0 0.0
    %449 = vmatpush1.msra.mxu0 0.0
    %450 = vmatprep.subr.mxu0 0.0
    %451 = vmatpush1.msra.mxu0 0.0
    %452 = vmatprep.subr.mxu0 0.0
    %453 = vmatpush1.msra.mxu0 0.0
    %454 = vmatprep.subr.mxu0 0.0
    %455 = vmatpush1.msra.mxu0 0.0
    %456 = vmatprep.subr.mxu0 0.0
    %457 = vmatpush1.msra.mxu0 0.0
    %458 = vmatprep.subr.mxu0 0.0
    %459 = vmatpush1.msra.mxu0 0.0
    %460 = vmatprep.subr.mxu0 0.0
    %461 = vmatpush1.msra.mxu0 0.0
    %462 = vmatprep.subr.mxu0 0.0
    %463 = vmatpush1.msra.mxu0 0.0
    %464 = vmatprep.subr.mxu0 0.0
    %465 = vmatpush1.msra.mxu0 0.0
    %466 = vmatprep.mubr.f32.mxu0 0.0
    %467 = vmatmul.mubr.f32.gmra.mrb[0].mxu0 %v302
    %v468 = vpop.f32.mrb[0].mxu0
    %v469 = vadd.f32 %v283, %v468
    %v470 = vpop.f32.mrb[0].mxu0
    %v471 = vadd.f32 %v283, %v470
    %472 = vmatprep.mubr.f32.mxu0 0.0
    %473 = vmatmul.mubr.f32.gmra.mrb[0].mxu0 %v305
    %v474 = vpop.f32.mrb[0].mxu0
    %v475 = vadd.f32 %v288, %v474
    %v476 = vpop.f32.mrb[0].mxu0
    %v477 = vadd.f32 %v288, %v476
    %478 = vmatprep.mubr.f32.mxu0 0.0
    %479 = vmatmul.mubr.f32.gmra.mrb[0].mxu0 %v308
    %v480 = vpop.f32.mrb[0].mxu0
    %v481 = vadd.f32 %v293, %v480
    %v482 = vpop.f32.mrb[0].mxu0
    %v483 = vadd.f32 %v293, %v482
    %484 = vmatprep.mubr.f32.mxu0 0.0
    %485 = vmatmul.mubr.f32.gmra.mrb[0].mxu0 %v311
    %v486 = vpop.f32.mrb[0].mxu0
    %v487 = vadd.f32 %v298, %v486
    %v488 = vpop.f32.mrb[0].mxu0
    %v489 = vadd.f32 %v298, %v488
    %490 = vdwg.mxu0
    %v491 = vtanh.pop %v380
    %v492 = vtanh.pop %v382
    %v493 = vtanh.pop %v469
    %v494 = vtanh.pop %v471
    %v495 = vtanh.pop %v386
    %v496 = vtanh.pop %v388
    %v497 = vtanh.pop %v475
    %v498 = vtanh.pop %v477
    %v499 = vtanh.pop %v392
    %v500 = vtanh.pop %v394
    %v501 = vtanh.pop %v481
    %v502 = vtanh.pop %v483
    %v503 = vtanh.pop %v398
    %v504 = vtanh.pop %v400
    %v505 = vtanh.pop %v487
    %v506 = vtanh.pop %v489
    %508 = vset.pattern.permute.xlu0 0
    %509 = vperm.xlu0 %508, %v48
    %v510 = vpop.permute.xlu0 %509
    %513 = vset.pattern.permute.xlu0 0
    %514 = vperm.xlu0 %513, %v49
    %v515 = vpop.permute.xlu0 %514
    %518 = vset.pattern.permute.xlu0 0
    %519 = vperm.xlu0 %518, %v50
    %v520 = vpop.permute.xlu0 %519
    %523 = vset.pattern.permute.xlu0 0
    %524 = vperm.xlu0 %523, %v51
    %v525 = vpop.permute.xlu0 %524
    %v528 = vsel %vm300, %v35, 0
    %v531 = vsel %vm300, %v36, 0
    %v534 = vsel %vm300, %v37, 0
    %v537 = vsel %vm300, %v38, 0
    %539 = vmatprep.subr.mxu0 %v492
    %540 = vmatpush1.msra.mxu0 %v491
    %541 = vmatprep.subr.mxu0 %v496
    %542 = vmatpush1.msra.mxu0 %v495
    %543 = vmatprep.subr.mxu0 %v500
    %544 = vmatpush1.msra.mxu0 %v499
    %545 = vmatprep.subr.mxu0 %v504
    %546 = vmatpush1.msra.mxu0 %v503
    %547 = vmatprep.subr.mxu0 0.0
    %548 = vmatpush1.msra.mxu0 0.0
    %549 = vmatprep.subr.mxu0 0.0
    %550 = vmatpush1.msra.mxu0 0.0
    %551 = vmatprep.subr.mxu0 0.0
    %552 = vmatpush1.msra.mxu0 0.0
    %553 = vmatprep.subr.mxu0 0.0
    %554 = vmatpush1.msra.mxu0 0.0
    %555 = vmatprep.subr.mxu0 0.0
    %556 = vmatpush1.msra.mxu0 0.0
    %557 = vmatprep.subr.mxu0 0.0
    %558 = vmatpush1.msra.mxu0 0.0
    %559 = vmatprep.subr.mxu0 0.0
    %560 = vmatpush1.msra.mxu0 0.0
    %561 = vmatprep.subr.mxu0 0.0
    %562 = vmatpush1.msra.mxu0 0.0
    %563 = vmatprep.subr.mxu0 0.0
    %564 = vmatpush1.msra.mxu0 0.0
    %565 = vmatprep.subr.mxu0 0.0
    %566 = vmatpush1.msra.mxu0 0.0
    %567 = vmatprep.subr.mxu0 0.0
    %568 = vmatpush1.msra.mxu0 0.0
    %569 = vmatprep.subr.mxu0 0.0
    %570 = vmatpush1.msra.mxu0 0.0
    %571 = vmatprep.subr.mxu0 0.0
    %572 = vmatpush1.msra.mxu0 0.0
    %573 = vmatprep.subr.mxu0 0.0
    %574 = vmatpush1.msra.mxu0 0.0
    %575 = vmatprep.subr.mxu0 0.0
    %576 = vmatpush1.msra.mxu0 0.0
    %577 = vmatprep.subr.mxu0 0.0
    %578 = vmatpush1.msra.mxu0 0.0
    %579 = vmatprep.subr.mxu0 0.0
    %580 = vmatpush1.msra.mxu0 0.0
    %581 = vmatprep.subr.mxu0 0.0
    %582 = vmatpush1.msra.mxu0 0.0
    %583 = vmatprep.subr.mxu0 0.0
    %584 = vmatpush1.msra.mxu0 0.0
    %585 = vmatprep.subr.mxu0 0.0
    %586 = vmatpush1.msra.mxu0 0.0
    %587 = vmatprep.subr.mxu0 0.0
    %588 = vmatpush1.msra.mxu0 0.0
    %589 = vmatprep.subr.mxu0 0.0
    %590 = vmatpush1.msra.mxu0 0.0
    %591 = vmatprep.subr.mxu0 0.0
    %592 = vmatpush1.msra.mxu0 0.0
    %593 = vmatprep.subr.mxu0 0.0
    %594 = vmatpush1.msra.mxu0 0.0
    %595 = vmatprep.subr.mxu0 0.0
    %596 = vmatpush1.msra.mxu0 0.0
    %597 = vmatprep.subr.mxu0 0.0
    %598 = vmatpush1.msra.mxu0 0.0
    %599 = vmatprep.subr.mxu0 0.0
    %600 = vmatpush1.msra.mxu0 0.0
    %601 = vmatprep.subr.mxu0 0.0
    %602 = vmatpush1.msra.mxu0 0.0
    %603 = vmatprep.mubr.f32.mxu0 0.0
    %604 = vmatmul.mubr.f32.gmra.mrb[0].mxu0 %v528
    %v605 = vpop.f32.mrb[0].mxu0
    %v606 = vadd.f32 %v510, %v605
    %v607 = vpop.f32.mrb[0].mxu0
    %v608 = vadd.f32 %v510, %v607
    %609 = vmatprep.mubr.f32.mxu0 0.0
    %610 = vmatmul.mubr.f32.gmra.mrb[0].mxu0 %v531
    %v611 = vpop.f32.mrb[0].mxu0
    %v612 = vadd.f32 %v515, %v611
    %v613 = vpop.f32.mrb[0].mxu0
    %v614 = vadd.f32 %v515, %v613
    %615 = vmatprep.mubr.f32.mxu0 0.0
    %616 = vmatmul.mubr.f32.gmra.mrb[0].mxu0 %v534
    %v617 = vpop.f32.mrb[0].mxu0
    %v618 = vadd.f32 %v520, %v617
    %v619 = vpop.f32.mrb[0].mxu0
    %v620 = vadd.f32 %v520, %v619
    %621 = vmatprep.mubr.f32.mxu0 0.0
    %622 = vmatmul.mubr.f32.gmra.mrb[0].mxu0 %v537
    %v623 = vpop.f32.mrb[0].mxu0
    %v624 = vadd.f32 %v525, %v623
    %v625 = vpop.f32.mrb[0].mxu0
    %v626 = vadd.f32 %v525, %v625
    %627 = vdwg.mxu0
    %628 = vmatprep.subr.mxu0 %v494
    %629 = vmatpush1.msra.mxu0 %v493
    %630 = vmatprep.subr.mxu0 %v498
    %631 = vmatpush1.msra.mxu0 %v497
    %632 = vmatprep.subr.mxu0 %v502
    %633 = vmatpush1.msra.mxu0 %v501
    %634 = vmatprep.subr.mxu0 %v506
    %635 = vmatpush1.msra.mxu0 %v505
    %636 = vmatprep.subr.mxu0 0.0
    %637 = vmatpush1.msra.mxu0 0.0
    %638 = vmatprep.subr.mxu0 0.0
    %639 = vmatpush1.msra.mxu0 0.0
    %640 = vmatprep.subr.mxu0 0.0
    %641 = vmatpush1.msra.mxu0 0.0
    %642 = vmatprep.subr.mxu0 0.0
    %643 = vmatpush1.msra.mxu0 0.0
    %644 = vmatprep.subr.mxu0 0.0
    %645 = vmatpush1.msra.mxu0 0.0
    %646 = vmatprep.subr.mxu0 0.0
    %647 = vmatpush1.msra.mxu0 0.0
    %648 = vmatprep.subr.mxu0 0.0
    %649 = vmatpush1.msra.mxu0 0.0
    %650 = vmatprep.subr.mxu0 0.0
    %651 = vmatpush1.msra.mxu0 0.0
    %652 = vmatprep.subr.mxu0 0.0
    %653 = vmatpush1.msra.mxu0 0.0
    %654 = vmatprep.subr.mxu0 0.0
    %655 = vmatpush1.msra.mxu0 0.0
    %656 = vmatprep.subr.mxu0 0.0
    %657 = vmatpush1.msra.mxu0 0.0
    %658 = vmatprep.subr.mxu0 0.0
    %659 = vmatpush1.msra.mxu0 0.0
    %660 = vmatprep.subr.mxu0 0.0
    %661 = vmatpush1.msra.mxu0 0.0
    %662 = vmatprep.subr.mxu0 0.0
    %663 = vmatpush1.msra.mxu0 0.0
    %664 = vmatprep.subr.mxu0 0.0
    %665 = vmatpush1.msra.mxu0 0.0
    %666 = vmatprep.subr.mxu0 0.0
    %667 = vmatpush1.msra.mxu0 0.0
    %668 = vmatprep.subr.mxu0 0.0
    %669 = vmatpush1.msra.mxu0 0.0
    %670 = vmatprep.subr.mxu0 0.0
    %671 = vmatpush1.msra.mxu0 0.0
    %672 = vmatprep.subr.mxu0 0.0
    %673 = vmatpush1.msra.mxu0 0.0
    %674 = vmatprep.subr.mxu0 0.0
    %675 = vmatpush1.msra.mxu0 0.0
    %676 = vmatprep.subr.mxu0 0.0
    %677 = vmatpush1.msra.mxu0 0.0
    %678 = vmatprep.subr.mxu0 0.0
    %679 = vmatpush1.msra.mxu0 0.0
    %680 = vmatprep.subr.mxu0 0.0
    %681 = vmatpush1.msra.mxu0 0.0
    %682 = vmatprep.subr.mxu0 0.0
    %683 = vmatpush1.msra.mxu0 0.0
    %684 = vmatprep.subr.mxu0 0.0
    %685 = vmatpush1.msra.mxu0 0.0
    %686 = vmatprep.subr.mxu0 0.0
    %687 = vmatpush1.msra.mxu0 0.0
    %688 = vmatprep.subr.mxu0 0.0
    %689 = vmatpush1.msra.mxu0 0.0
    %690 = vmatprep.subr.mxu0 0.0
    %691 = vmatpush1.msra.mxu0 0.0
    %692 = vmatprep.mubr.f32.mxu0 0.0
    %693 = vmatmul.mubr.f32.gmra.mrb[0].mxu0 %v528
    %v694 = vpop.f32.mrb[0].mxu0
    %v695 = vadd.f32 %v510, %v694
    %v696 = vpop.f32.mrb[0].mxu0
    %v697 = vadd.f32 %v510, %v696
    %698 = vmatprep.mubr.f32.mxu0 0.0
    %699 = vmatmul.mubr.f32.gmra.mrb[0].mxu0 %v531
    %v700 = vpop.f32.mrb[0].mxu0
    %v701 = vadd.f32 %v515, %v700
    %v702 = vpop.f32.mrb[0].mxu0
    %v703 = vadd.f32 %v515, %v702
    %704 = vmatprep.mubr.f32.mxu0 0.0
    %705 = vmatmul.mubr.f32.gmra.mrb[0].mxu0 %v534
    %v706 = vpop.f32.mrb[0].mxu0
    %v707 = vadd.f32 %v520, %v706
    %v708 = vpop.f32.mrb[0].mxu0
    %v709 = vadd.f32 %v520, %v708
    %710 = vmatprep.mubr.f32.mxu0 0.0
    %711 = vmatmul.mubr.f32.gmra.mrb[0].mxu0 %v537
    %v712 = vpop.f32.mrb[0].mxu0
    %v713 = vadd.f32 %v525, %v712
    %v714 = vpop.f32.mrb[0].mxu0
    %v715 = vadd.f32 %v525, %v714
    %716 = vdwg.mxu0
    %v717 = vtanh.pop %v606
    %v718 = vtanh.pop %v608
    %v719 = vtanh.pop %v695
    %v720 = vtanh.pop %v697
    %v721 = vtanh.pop %v612
    %v722 = vtanh.pop %v614
    %v723 = vtanh.pop %v701
    %v724 = vtanh.pop %v703
    %v725 = vtanh.pop %v618
    %v726 = vtanh.pop %v620
    %v727 = vtanh.pop %v707
    %v728 = vtanh.pop %v709
    %v729 = vtanh.pop %v624
    %v730 = vtanh.pop %v626
    %v731 = vtanh.pop %v713
    %v732 = vtanh.pop %v715
    %734 = vset.pattern.permute.xlu0 0
    %735 = vperm.xlu0 %734, %v52
    %v736 = vpop.permute.xlu0 %735
    %v739 = vsel %vm300, %v39, 0
    %741 = vmatprep.subr.mxu0 %v718
    %742 = vmatpush1.msra.mxu0 %v717
    %743 = vmatprep.subr.mxu0 %v722
    %744 = vmatpush1.msra.mxu0 %v721
    %745 = vmatprep.subr.mxu0 %v726
    %746 = vmatpush1.msra.mxu0 %v725
    %747 = vmatprep.subr.mxu0 %v730
    %748 = vmatpush1.msra.mxu0 %v729
    %749 = vmatprep.subr.mxu0 0.0
    %750 = vmatpush1.msra.mxu0 0.0
    %751 = vmatprep.subr.mxu0 0.0
    %752 = vmatpush1.msra.mxu0 0.0
    %753 = vmatprep.subr.mxu0 0.0
    %754 = vmatpush1.msra.mxu0 0.0
    %755 = vmatprep.subr.mxu0 0.0
    %756 = vmatpush1.msra.mxu0 0.0
    %757 = vmatprep.subr.mxu0 0.0
    %758 = vmatpush1.msra.mxu0 0.0
    %759 = vmatprep.subr.mxu0 0.0
    %760 = vmatpush1.msra.mxu0 0.0
    %761 = vmatprep.subr.mxu0 0.0
    %762 = vmatpush1.msra.mxu0 0.0
    %763 = vmatprep.subr.mxu0 0.0
    %764 = vmatpush1.msra.mxu0 0.0
    %765 = vmatprep.subr.mxu0 0.0
    %766 = vmatpush1.msra.mxu0 0.0
    %767 = vmatprep.subr.mxu0 0.0
    %768 = vmatpush1.msra.mxu0 0.0
    %769 = vmatprep.subr.mxu0 0.0
    %770 = vmatpush1.msra.mxu0 0.0
    %771 = vmatprep.subr.mxu0 0.0
    %772 = vmatpush1.msra.mxu0 0.0
    %773 = vmatprep.subr.mxu0 0.0
    %774 = vmatpush1.msra.mxu0 0.0
    %775 = vmatprep.subr.mxu0 0.0
    %776 = vmatpush1.msra.mxu0 0.0
    %777 = vmatprep.subr.mxu0 0.0
    %778 = vmatpush1.msra.mxu0 0.0
    %779 = vmatprep.subr.mxu0 0.0
    %780 = vmatpush1.msra.mxu0 0.0
    %781 = vmatprep.subr.mxu0 0.0
    %782 = vmatpush1.msra.mxu0 0.0
    %783 = vmatprep.subr.mxu0 0.0
    %784 = vmatpush1.msra.mxu0 0.0
    %785 = vmatprep.subr.mxu0 0.0
    %786 = vmatpush1.msra.mxu0 0.0
    %787 = vmatprep.subr.mxu0 0.0
    %788 = vmatpush1.msra.mxu0 0.0
    %789 = vmatprep.subr.mxu0 0.0
    %790 = vmatpush1.msra.mxu0 0.0
    %791 = vmatprep.subr.mxu0 0.0
    %792 = vmatpush1.msra.mxu0 0.0
    %793 = vmatprep.subr.mxu0 0.0
    %794 = vmatpush1.msra.mxu0 0.0
    %795 = vmatprep.subr.mxu0 0.0
    %796 = vmatpush1.msra.mxu0 0.0
    %797 = vmatprep.subr.mxu0 0.0
    %798 = vmatpush1.msra.mxu0 0.0
    %799 = vmatprep.subr.mxu0 0.0
    %800 = vmatpush1.msra.mxu0 0.0
    %801 = vmatprep.subr.mxu0 0.0
    %802 = vmatpush1.msra.mxu0 0.0
    %803 = vmatprep.subr.mxu0 0.0
    %804 = vmatpush1.msra.mxu0 0.0
    %805 = vmatprep.mubr.f32.mxu0 0.0
    %806 = vmatmul.mubr.f32.gmra.mrb[0].mxu0 %v739
    %v807 = vpop.f32.mrb[0].mxu0
    %v808 = vadd.f32 %v736, %v807
    %v809 = vpop.f32.mrb[0].mxu0
    %v810 = vadd.f32 %v736, %v809
    %811 = vdwg.mxu0
    %812 = vmatprep.subr.mxu0 %v720
    %813 = vmatpush1.msra.mxu0 %v719
    %814 = vmatprep.subr.mxu0 %v724
    %815 = vmatpush1.msra.mxu0 %v723
    %816 = vmatprep.subr.mxu0 %v728
    %817 = vmatpush1.msra.mxu0 %v727
    %818 = vmatprep.subr.mxu0 %v732
    %819 = vmatpush1.msra.mxu0 %v731
    %820 = vmatprep.subr.mxu0 0.0
    %821 = vmatpush1.msra.mxu0 0.0
    %822 = vmatprep.subr.mxu0 0.0
    %823 = vmatpush1.msra.mxu0 0.0
    %824 = vmatprep.subr.mxu0 0.0
    %825 = vmatpush1.msra.mxu0 0.0
    %826 = vmatprep.subr.mxu0 0.0
    %827 = vmatpush1.msra.mxu0 0.0
    %828 = vmatprep.subr.mxu0 0.0
    %829 = vmatpush1.msra.mxu0 0.0
    %830 = vmatprep.subr.mxu0 0.0
    %831 = vmatpush1.msra.mxu0 0.0
    %832 = vmatprep.subr.mxu0 0.0
    %833 = vmatpush1.msra.mxu0 0.0
    %834 = vmatprep.subr.mxu0 0.0
    %835 = vmatpush1.msra.mxu0 0.0
    %836 = vmatprep.subr.mxu0 0.0
    %837 = vmatpush1.msra.mxu0 0.0
    %838 = vmatprep.subr.mxu0 0.0
    %839 = vmatpush1.msra.mxu0 0.0
    %840 = vmatprep.subr.mxu0 0.0
    %841 = vmatpush1.msra.mxu0 0.0
    %842 = vmatprep.subr.mxu0 0.0
    %843 = vmatpush1.msra.mxu0 0.0
    %844 = vmatprep.subr.mxu0 0.0
    %845 = vmatpush1.msra.mxu0 0.0
    %846 = vmatprep.subr.mxu0 0.0
    %847 = vmatpush1.msra.mxu0 0.0
    %848 = vmatprep.subr.mxu0 0.0
    %849 = vmatpush1.msra.mxu0 0.0
    %850 = vmatprep.subr.mxu0 0.0
    %851 = vmatpush1.msra.mxu0 0.0
    %852 = vmatprep.subr.mxu0 0.0
    %853 = vmatpush1.msra.mxu0 0.0
    %854 = vmatprep.subr.mxu0 0.0
    %855 = vmatpush1.msra.mxu0 0.0
    %856 = vmatprep.subr.mxu0 0.0
    %857 = vmatpush1.msra.mxu0 0.0
    %858 = vmatprep.subr.mxu0 0.0
    %859 = vmatpush1.msra.mxu0 0.0
    %860 = vmatprep.subr.mxu0 0.0
    %861 = vmatpush1.msra.mxu0 0.0
    %862 = vmatprep.subr.mxu0 0.0
    %863 = vmatpush1.msra.mxu0 0.0
    %864 = vmatprep.subr.mxu0 0.0
    %865 = vmatpush1.msra.mxu0 0.0
    %866 = vmatprep.subr.mxu0 0.0
    %867 = vmatpush1.msra.mxu0 0.0
    %868 = vmatprep.subr.mxu0 0.0
    %869 = vmatpush1.msra.mxu0 0.0
    %870 = vmatprep.subr.mxu0 0.0
    %871 = vmatpush1.msra.mxu0 0.0
    %872 = vmatprep.subr.mxu0 0.0
    %873 = vmatpush1.msra.mxu0 0.0
    %874 = vmatprep.subr.mxu0 0.0
    %875 = vmatpush1.msra.mxu0 0.0
    %876 = vmatprep.mubr.f32.mxu0 0.0
    %877 = vmatmul.mubr.f32.gmra.mrb[0].mxu0 %v739
    %v878 = vpop.f32.mrb[0].mxu0
    %v879 = vadd.f32 %v736, %v878
    %v880 = vpop.f32.mrb[0].mxu0
    %v881 = vadd.f32 %v736, %v880
    %882 = vdwg.mxu0
    %v884 = vsel %vm73, %v30, 0
    %886 = vmatprep.subr.mxu0 %v19
    %887 = vmatpush1.msra.mxu0 %v18
    %888 = vmatprep.subr.mxu0 %v23
    %889 = vmatpush1.msra.mxu0 %v22
    %890 = vmatprep.subr.mxu0 0.0
    %891 = vmatpush1.msra.mxu0 0.0
    %892 = vmatprep.subr.mxu0 0.0
    %893 = vmatpush1.msra.mxu0 0.0
    %894 = vmatprep.subr.mxu0 0.0
    %895 = vmatpush1.msra.mxu0 0.0
    %896 = vmatprep.subr.mxu0 0.0
    %897 = vmatpush1.msra.mxu0 0.0
    %898 = vmatprep.subr.mxu0 0.0
    %899 = vmatpush1.msra.mxu0 0.0
    %900 = vmatprep.subr.mxu0 0.0
    %901 = vmatpush1.msra.mxu0 0.0
    %902 = vmatprep.subr.mxu0 0.0
    %903 = vmatpush1.msra.mxu0 0.0
    %904 = vmatprep.subr.mxu0 0.0
    %905 = vmatpush1.msra.mxu0 0.0
    %906 = vmatprep.subr.mxu0 0.0
    %907 = vmatpush1.msra.mxu0 0.0
    %908 = vmatprep.subr.mxu0 0.0
    %909 = vmatpush1.msra.mxu0 0.0
    %910 = vmatprep.subr.mxu0 0.0
    %911 = vmatpush1.msra.mxu0 0.0
    %912 = vmatprep.subr.mxu0 0.0
    %913 = vmatpush1.msra.mxu0 0.0
    %914 = vmatprep.subr.mxu0 0.0
    %915 = vmatpush1.msra.mxu0 0.0
    %916 = vmatprep.subr.mxu0 0.0
    %917 = vmatpush1.msra.mxu0 0.0
    %918 = vmatprep.subr.mxu0 0.0
    %919 = vmatpush1.msra.mxu0 0.0
    %920 = vmatprep.subr.mxu0 0.0
    %921 = vmatpush1.msra.mxu0 0.0
    %922 = vmatprep.subr.mxu0 0.0
    %923 = vmatpush1.msra.mxu0 0.0
    %924 = vmatprep.subr.mxu0 0.0
    %925 = vmatpush1.msra.mxu0 0.0
    %926 = vmatprep.subr.mxu0 0.0
    %927 = vmatpush1.msra.mxu0 0.0
    %928 = vmatprep.subr.mxu0 0.0
    %929 = vmatpush1.msra.mxu0 0.0
    %930 = vmatprep.subr.mxu0 0.0
    %931 = vmatpush1.msra.mxu0 0.0
    %932 = vmatprep.subr.mxu0 0.0
    %933 = vmatpush1.msra.mxu0 0.0
    %934 = vmatprep.subr.mxu0 0.0
    %935 = vmatpush1.msra.mxu0 0.0
    %936 = vmatprep.subr.mxu0 0.0
    %937 = vmatpush1.msra.mxu0 0.0
    %938 = vmatprep.subr.mxu0 0.0
    %939 = vmatpush1.msra.mxu0 0.0
    %940 = vmatprep.subr.mxu0 0.0
    %941 = vmatpush1.msra.mxu0 0.0
    %942 = vmatprep.subr.mxu0 0.0
    %943 = vmatpush1.msra.mxu0 0.0
    %944 = vmatprep.subr.mxu0 0.0
    %945 = vmatpush1.msra.mxu0 0.0
    %946 = vmatprep.subr.mxu0 0.0
    %947 = vmatpush1.msra.mxu0 0.0
    %948 = vmatprep.subr.mxu0 0.0
    %949 = vmatpush1.msra.mxu0 0.0
    %950 = vmatprep.mubr.f32.mxu0 0.0
    %951 = vmatmul.mubr.f32.gmra.mrb[0].mxu0 %v884
    %v952 = vpop.f32.mrb[0].mxu0
    %v953 = vadd.f32 0.0, %v952
    %v954 = vpop.f32.mrb[0].mxu0
    %v955 = vadd.f32 0.0, %v954
    %956 = vdwg.mxu0
    %957 = vmatprep.subr.mxu0 %v21
    %958 = vmatpush1.msra.mxu0 %v20
    %959 = vmatprep.subr.mxu0 %v25
    %960 = vmatpush1.msra.mxu0 %v24
    %961 = vmatprep.subr.mxu0 0.0
    %962 = vmatpush1.msra.mxu0 0.0
    %963 = vmatprep.subr.mxu0 0.0
    %964 = vmatpush1.msra.mxu0 0.0
    %965 = vmatprep.subr.mxu0 0.0
    %966 = vmatpush1.msra.mxu0 0.0
    %967 = vmatprep.subr.mxu0 0.0
    %968 = vmatpush1.msra.mxu0 0.0
    %969 = vmatprep.subr.mxu0 0.0
    %970 = vmatpush1.msra.mxu0 0.0
    %971 = vmatprep.subr.mxu0 0.0
    %972 = vmatpush1.msra.mxu0 0.0
    %973 = vmatprep.subr.mxu0 0.0
    %974 = vmatpush1.msra.mxu0 0.0
    %975 = vmatprep.subr.mxu0 0.0
    %976 = vmatpush1.msra.mxu0 0.0
    %977 = vmatprep.subr.mxu0 0.0
    %978 = vmatpush1.msra.mxu0 0.0
    %979 = vmatprep.subr.mxu0 0.0
    %980 = vmatpush1.msra.mxu0 0.0
    %981 = vmatprep.subr.mxu0 0.0
    %982 = vmatpush1.msra.mxu0 0.0
    %983 = vmatprep.subr.mxu0 0.0
    %984 = vmatpush1.msra.mxu0 0.0
    %985 = vmatprep.subr.mxu0 0.0
    %986 = vmatpush1.msra.mxu0 0.0
    %987 = vmatprep.subr.mxu0 0.0
    %988 = vmatpush1.msra.mxu0 0.0
    %989 = vmatprep.subr.mxu0 0.0
    %990 = vmatpush1.msra.mxu0 0.0
    %991 = vmatprep.subr.mxu0 0.0
    %992 = vmatpush1.msra.mxu0 0.0
    %993 = vmatprep.subr.mxu0 0.0
    %994 = vmatpush1.msra.mxu0 0.0
    %995 = vmatprep.subr.mxu0 0.0
    %996 = vmatpush1.msra.mxu0 0.0
    %997 = vmatprep.subr.mxu0 0.0
    %998 = vmatpush1.msra.mxu0 0.0
    %999 = vmatprep.subr.mxu0 0.0
    %1000 = vmatpush1.msra.mxu0 0.0
    %1001 = vmatprep.subr.mxu0 0.0
    %1002 = vmatpush1.msra.mxu0 0.0
    %1003 = vmatprep.subr.mxu0 0.0
    %1004 = vmatpush1.msra.mxu0 0.0
    %1005 = vmatprep.subr.mxu0 0.0
    %1006 = vmatpush1.msra.mxu0 0.0
    %1007 = vmatprep.subr.mxu0 0.0
    %1008 = vmatpush1.msra.mxu0 0.0
    %1009 = vmatprep.subr.mxu0 0.0
    %1010 = vmatpush1.msra.mxu0 0.0
    %1011 = vmatprep.subr.mxu0 0.0
    %1012 = vmatpush1.msra.mxu0 0.0
    %1013 = vmatprep.subr.mxu0 0.0
    %1014 = vmatpush1.msra.mxu0 0.0
    %1015 = vmatprep.subr.mxu0 0.0
    %1016 = vmatpush1.msra.mxu0 0.0
    %1017 = vmatprep.subr.mxu0 0.0
    %1018 = vmatpush1.msra.mxu0 0.0
    %1019 = vmatprep.subr.mxu0 0.0
    %1020 = vmatpush1.msra.mxu0 0.0
    %1021 = vmatprep.mubr.f32.mxu0 0.0
    %1022 = vmatmul.mubr.f32.gmra.mrb[0].mxu0 %v884
    %v1023 = vpop.f32.mrb[0].mxu0
    %v1024 = vadd.f32 0.0, %v1023
    %v1025 = vpop.f32.mrb[0].mxu0
    %v1026 = vadd.f32 0.0, %v1025
    %1027 = vdwg.mxu0
    %v1028 = vtanh.pop %v808
    %v1029 = vtanh.pop %v810
    %v1030 = vtanh.pop %v879
    %v1031 = vtanh.pop %v881
    %v1032 = vadd.f32 %v1028, %v953
    %v1033 = vadd.f32 %v1029, %v955
    %v1034 = vadd.f32 %v1030, %v1024
    %v1035 = vadd.f32 %v1031, %v1026
    %1036 = vst [vmem:[#allocation2] sm:$0xff] %v1032
    %1037 = vst [vmem:[#allocation2 + $0x8] sm:$0xff] %v1033
    %1038 = vst [vmem:[#allocation2 + $0x10] sm:$0xff] %v1034
    %1039 = vst [vmem:[#allocation2 + $0x18] sm:$0xff] %v1035
    // Predicated region
    $region18: #{tpu_custom_call.1} parent=1 // pred_check
      _
    $region19: #{tpu_custom_call.1} parent=1 // pred_check_branch
      %1041 = sbr.rel (0) target = $region21
    $region20: #{tpu_custom_call.1} parent=1 // pred_region
      %s1043 = ssub.s32 512, 512
      %1044 = vsyncadd [#allocation3], %s1043
      %s1046 = sshll.u32 [#allocation2], 4
      %s1047 = int_to_ptr.vmem [resolvable:$true] %s1046
      %1049 = dma.vmem_to_hbm [thread:$0]  %s1047, 512, %s4, [#allocation3]
    $region21: #{tpu_custom_call.1} parent=1 // pred_fallthru
      _
    // Predicated region
    $region22: #{tpu_custom_call.1} parent=1 // pred_check
      _
    $region23: #{tpu_custom_call.1} parent=1 // pred_check_branch
      %1051 = sbr.rel (0) target = $region25
    $region24: #{tpu_custom_call.1} parent=1 // pred_region
      %1052 = dma.done [#allocation3], 512
    $region25: #{tpu_custom_call.1} parent=1 // pred_fallthru
      _
    %1053 = vsyncpa [#allocation3], 1

</llo_original>
